<compile_context>
chip_gen: v6e
topology: v6e:2x2x1
jax: 0.10.0
libtpu: 0.0.40
codegen_flags: <defaults>
</compile_context>

<pallas_src>
import functools

import jax
import jax.numpy as jnp
from jax.experimental import pallas as pl
from jax.experimental.pallas import tpu as pltpu


def _fusion_kernel(g_ref, f_ref, wg_ref, wf_ref, b_ref, o_ref):
    # Two MXU matmuls with f32 accumulation, then the bias add on the VPU.
    acc = jnp.dot(g_ref[...], wg_ref[...], preferred_element_type=jnp.float32)
    acc = acc + jnp.dot(f_ref[...], wf_ref[...], preferred_element_type=jnp.float32)
    acc = acc + b_ref[...]  # (1, dim) f32 broadcasts over rows
    o_ref[...] = acc.astype(o_ref.dtype)


def _pick_tile_m(M, dim_g, dim_f, dim, in_bytes, out_bytes, sublane,
                 vmem_budget_bytes=24 << 20, max_tile=1024):
    """Largest row tile (multiple of the sublane granule, capped at max_tile)
    whose double-buffered input+output footprint fits a conservative VMEM
    budget (sized for v7x's 32 MiB scoped default, with headroom)."""
    per_row = 2 * ((dim_g + dim_f) * in_bytes + dim * out_bytes)   # dbl-buffered tiles
    weight_bytes = 2 * ((dim_g + dim_f) * dim * in_bytes + dim * 4)  # dbl-buffered weights+bias
    budget = max(vmem_budget_bytes - weight_bytes, sublane * per_row)
    cap = max(sublane, (budget // per_row) // sublane * sublane)
    m_pad_to_sublane = pl.cdiv(M, sublane) * sublane
    tile = min(max_tile, cap, m_pad_to_sublane)
    return max(sublane, (tile // sublane) * sublane)


def feature_fusion(gesture_features, facial_features, conv_weight, conv_bias,
                   *, tile_m=None, compute_dtype=None):
    """Pallas implementation of FeatureFusion.forward.

    gesture_features: (B, T, dim_g)
    facial_features : (B, T, dim_f)
    conv_weight     : (dim, dim_g + dim_f, 1)   (PyTorch Conv1d weight layout)
    conv_bias       : (dim,)
    compute_dtype   : optional dtype (e.g. jnp.bfloat16) for the matmul inputs;
                      accumulation and bias stay f32.
    returns         : (B, T, dim)
    """
    B, T, dim_g = gesture_features.shape
    _, _, dim_f = facial_features.shape
    dim = conv_weight.shape[0]
    M = B * T

    out_dtype = jnp.result_type(gesture_features.dtype, facial_features.dtype)
    in_dtype = jnp.dtype(compute_dtype) if compute_dtype is not None else out_dtype

    # Split the conv weight into the two halves acting on gesture / facial
    # features, drop the kernel_size=1 axis, transpose to (Cin, dim).
    w = conv_weight[:, :, 0]                                   # (dim, dim_g + dim_f)
    wg = jnp.transpose(w[:, :dim_g]).astype(in_dtype)          # (dim_g, dim)
    wf = jnp.transpose(w[:, dim_g:]).astype(in_dtype)          # (dim_f, dim)
    bias = conv_bias.reshape(1, dim).astype(jnp.float32)       # f32 bias add in-kernel

    g2d = gesture_features.reshape(M, dim_g).astype(in_dtype)
    f2d = facial_features.reshape(M, dim_f).astype(in_dtype)

    in_bytes = jnp.dtype(in_dtype).itemsize
    out_bytes = jnp.dtype(out_dtype).itemsize
    sublane = 8 if in_bytes >= 4 else 16

    if tile_m is None:
        tile_m = _pick_tile_m(M, dim_g, dim_f, dim, in_bytes, out_bytes, sublane)
    tile_m = max(sublane, (tile_m // sublane) * sublane)

    # Pad the row axis so the grid covers it exactly; padded rows are discarded.
    grid_m = pl.cdiv(M, tile_m)
    M_pad = grid_m * tile_m
    if M_pad != M:
        pad = ((0, M_pad - M), (0, 0))
        g2d = jnp.pad(g2d, pad)
        f2d = jnp.pad(f2d, pad)

    out2d = pl.pallas_call(
        _fusion_kernel,
        out_shape=jax.ShapeDtypeStruct((M_pad, dim), out_dtype),
        grid_spec=pltpu.PrefetchScalarGridSpec(
            num_scalar_prefetch=0,
            grid=(grid_m,),
            in_specs=[
                pl.BlockSpec((tile_m, dim_g), lambda i: (i, 0)),
                pl.BlockSpec((tile_m, dim_f), lambda i: (i, 0)),
                # Weights / bias: index_map is constant, so they stay resident
                # in VMEM across grid steps (no re-DMA per tile).
                pl.BlockSpec((dim_g, dim), lambda i: (0, 0)),
                pl.BlockSpec((dim_f, dim), lambda i: (0, 0)),
                pl.BlockSpec((1, dim), lambda i: (0, 0)),
            ],
            out_specs=pl.BlockSpec((tile_m, dim), lambda i: (i, 0)),
        ),
        compiler_params=pltpu.CompilerParams(
            dimension_semantics=("parallel",),   # row tiles shard across v7x's 2 TCs
            vmem_limit_bytes=32 * 1024 * 1024,   # safe on v5e/v6e/v7x
        ),
    )(g2d, f2d, wg, wf, bias)

    if M_pad != M:
        out2d = out2d[:M]
    return out2d.reshape(B, T, dim)


def _reference(gesture_features, facial_features, conv_weight, conv_bias):
    # Pure-JAX reference mirroring the PyTorch forward exactly.
    x = jnp.concatenate([gesture_features, facial_features], axis=-1)  # (B,T,Cin)
    w = conv_weight[:, :, 0]                                           # (dim, Cin)
    return jnp.einsum("btc,dc->btd", x, w) + conv_bias[None, None, :]


if __name__ == "__main__":
    # Small, forward-consistent shapes (B*T deliberately not a "nice" tile size
    # would also work thanks to wrapper-side padding).
    B, T = 2, 8
    dim_g, dim_f, dim = 16, 16, 32

    key = jax.random.PRNGKey(0)
    k_g, k_f, k_w, k_b = jax.random.split(key, 4)

    gesture = jax.random.normal(k_g, (B, T, dim_g), dtype=jnp.float32)
    facial = jax.random.normal(k_f, (B, T, dim_f), dtype=jnp.float32)

    # Deterministic Conv1d parameter init (kaiming-uniform-style bound).
    fan_in = dim_g + dim_f
    bound = 1.0 / (fan_in ** 0.5)
    conv_weight = jax.random.uniform(
        k_w, (dim, dim_g + dim_f, 1), minval=-bound, maxval=bound,
        dtype=jnp.float32)
    conv_bias = jax.random.uniform(
        k_b, (dim,), minval=-bound, maxval=bound, dtype=jnp.float32)

    ref = _reference(gesture, facial, conv_weight, conv_bias)

    # f32 path: exact-semantics check.
    out = feature_fusion(gesture, facial, conv_weight, conv_bias)
    out = jax.block_until_ready(out)
    assert out.shape == (B, T, dim)
    assert jnp.allclose(out, ref, atol=1e-5, rtol=1e-5), "f32 mismatch vs reference"

    # bf16 compute path (halves HBM traffic; f32 accumulation): loose tolerance.
    out_bf16 = feature_fusion(
        gesture.astype(jnp.bfloat16), facial.astype(jnp.bfloat16),
        conv_weight, conv_bias, compute_dtype=jnp.bfloat16)
    out_bf16 = jax.block_until_ready(out_bf16)
    assert out_bf16.shape == (B, T, dim)
    assert jnp.allclose(out_bf16.astype(jnp.float32), ref, atol=5e-2, rtol=5e-2), \
        "bf16 mismatch vs reference"

    print("KERNEL_OK")
</pallas_src>

<mosaic_0001>
module attributes {stable_mosaic.version = 11 : i64} {
  func.func @_fusion_kernel(%arg0: i32, %arg1: memref<16x16xf32, #tpu.memory_space<vmem>>, %arg2: memref<16x16xf32, #tpu.memory_space<vmem>>, %arg3: memref<16x32xf32, #tpu.memory_space<vmem>>, %arg4: memref<16x32xf32, #tpu.memory_space<vmem>>, %arg5: memref<1x32xf32, #tpu.memory_space<vmem>>, %arg6: memref<16x32xf32, #tpu.memory_space<vmem>>) attributes {dimension_semantics = [#tpu.dimension_semantics<parallel>], iteration_bounds = array<i64: 1>, scalar_prefetch = 0 : i64, scratch_operands = 0 : i64, tpu.core_type = #tpu.core_type<tc>, window_params = [{transform_indices = @transform_0, window_bounds = array<i64: 16, 16>}, {transform_indices = @transform_1, window_bounds = array<i64: 16, 16>}, {pipeline_mode = #tpu.pipeline_mode<synchronous>, transform_indices = @transform_2, window_bounds = array<i64: 16, 32>}, {pipeline_mode = #tpu.pipeline_mode<synchronous>, transform_indices = @transform_3, window_bounds = array<i64: 16, 32>}, {pipeline_mode = #tpu.pipeline_mode<synchronous>, transform_indices = @transform_4, window_bounds = array<i64: 1, 32>}, {transform_indices = @transform_5, window_bounds = array<i64: 16, 32>}]} {
    %c0 = arith.constant 0 : index
    %c0_0 = arith.constant 0 : index
    %0 = vector.load %arg1[%c0, %c0_0] : memref<16x16xf32, #tpu.memory_space<vmem>>, vector<16x16xf32>
    %c0_1 = arith.constant 0 : index
    %c0_2 = arith.constant 0 : index
    %1 = vector.load %arg3[%c0_1, %c0_2] : memref<16x32xf32, #tpu.memory_space<vmem>>, vector<16x32xf32>
    %cst = arith.constant dense<0.000000e+00> : vector<16x32xf32>
    %2 = tpu.matmul %0, %1, %cst {dimension_numbers = #tpu.dot_dimension_numbers<[1], [0], [0], [1], [0, 0, 1, 1], [], []>} : vector<16x16xf32>, vector<16x32xf32>, vector<16x32xf32> -> vector<16x32xf32>
    %c0_3 = arith.constant 0 : index
    %c0_4 = arith.constant 0 : index
    %3 = vector.load %arg2[%c0_3, %c0_4] : memref<16x16xf32, #tpu.memory_space<vmem>>, vector<16x16xf32>
    %c0_5 = arith.constant 0 : index
    %c0_6 = arith.constant 0 : index
    %4 = vector.load %arg4[%c0_5, %c0_6] : memref<16x32xf32, #tpu.memory_space<vmem>>, vector<16x32xf32>
    %cst_7 = arith.constant dense<0.000000e+00> : vector<16x32xf32>
    %5 = tpu.matmul %3, %4, %cst_7 {dimension_numbers = #tpu.dot_dimension_numbers<[1], [0], [0], [1], [0, 0, 1, 1], [], []>} : vector<16x16xf32>, vector<16x32xf32>, vector<16x32xf32> -> vector<16x32xf32>
    %6 = arith.addf %2, %5 : vector<16x32xf32>
    %c0_8 = arith.constant 0 : index
    %c0_9 = arith.constant 0 : index
    %7 = vector.load %arg5[%c0_8, %c0_9] : memref<1x32xf32, #tpu.memory_space<vmem>>, vector<1x32xf32>
    %8 = vector.broadcast %7 : vector<1x32xf32> to vector<16x32xf32>
    %9 = arith.addf %6, %8 : vector<16x32xf32>
    %c0_10 = arith.constant 0 : index
    %c0_11 = arith.constant 0 : index
    %10 = vector.load %arg6[%c0_10, %c0_11] : memref<16x32xf32, #tpu.memory_space<vmem>>, vector<16x32xf32>
    tpu.vector_store %arg6[%c0_10, %c0_11], %9 {strides = array<i32>} : memref<16x32xf32, #tpu.memory_space<vmem>>, vector<16x32xf32>,
    return
  }
  func.func @transform_0(%arg0: i32) -> (i32, i32) {
    %c0_i32 = arith.constant 0 : i32
    %c0_i32_0 = arith.constant 0 : i32
    return %arg0, %c0_i32 : i32, i32
  }
  func.func @transform_1(%arg0: i32) -> (i32, i32) {
    %c0_i32 = arith.constant 0 : i32
    %c0_i32_0 = arith.constant 0 : i32
    return %arg0, %c0_i32 : i32, i32
  }
  func.func @transform_2(%arg0: i32) -> (i32, i32) {
    %c0_i32 = arith.constant 0 : i32
    %c0_i32_0 = arith.constant 0 : i32
    %c0_i32_1 = arith.constant 0 : i32
    return %c0_i32, %c0_i32_0 : i32, i32
  }
  func.func @transform_3(%arg0: i32) -> (i32, i32) {
    %c0_i32 = arith.constant 0 : i32
    %c0_i32_0 = arith.constant 0 : i32
    %c0_i32_1 = arith.constant 0 : i32
    return %c0_i32, %c0_i32_0 : i32, i32
  }
  func.func @transform_4(%arg0: i32) -> (i32, i32) {
    %c0_i32 = arith.constant 0 : i32
    %c0_i32_0 = arith.constant 0 : i32
    %c0_i32_1 = arith.constant 0 : i32
    return %c0_i32, %c0_i32_0 : i32, i32
  }
  func.func @transform_5(%arg0: i32) -> (i32, i32) {
    %c0_i32 = arith.constant 0 : i32
    %c0_i32_0 = arith.constant 0 : i32
    return %arg0, %c0_i32 : i32, i32
  }
}

</mosaic_0001>

<llo_original>
// kernel: tpu_custom_call.1
$region0: #{tpu_custom_call.1}
  #allocation0 [shape = 'u32[]', space=smem, size = 0x4, offset = 0x4, fixed_abs, tag = 'smem constant byte address 0x4 - core index']
  #allocation1 [shape = 'u32[144,128]{1,0:T(1,128)}', space=vmem, size = 0x12000, scoped, tag = 'internal scratch']
  %s0 = inlined_call_operand.hbm [shape: f32[16,16], index: 0, kind: input, shape index: {}]
  %s1 = inlined_call_operand.hbm [shape: f32[16,16], index: 1, kind: input, shape index: {}]
  %s2 = inlined_call_operand.hbm [shape: f32[16,32], index: 2, kind: input, shape index: {}]
  %s3 = inlined_call_operand.hbm [shape: f32[16,32], index: 3, kind: input, shape index: {}]
  %s4 = inlined_call_operand.vmem [shape: f32[1,32], index: 4, kind: input, shape index: {}]
  %s5 = inlined_call_operand.hbm [shape: f32[16,32], index: 5, kind: output, shape index: {}]
  %s6 = sld [smem:[#allocation0]]
  $region46: #{tpu_custom_call.1} parent=0
    _
  %s8 = ssub.s32 1, %s6
  %s9 = scalar_select 0, %s8, %s6
  $region1: #{tpu_custom_call.1} parent=0
    #allocation2 [shape = 'u8[8192]{0}', space=vmem, size = 0x2000, scoped, tag = 'input window, operand 0, single buffered']
    #allocation3 [shape = 's32[1]{0}', space=sflag, size = 0x4, scoped, tag = 'scoped memory for tpu_custom_call.1']
    #allocation4 [shape = 's32[1]{0}', space=sflag, size = 0x4, scoped, tag = 'scoped memory for tpu_custom_call.1']
    #allocation5 [shape = 'u8[8192]{0}', space=vmem, size = 0x2000, scoped, tag = 'input window, operand 1, single buffered']
    #allocation6 [shape = 's32[1]{0}', space=sflag, size = 0x4, scoped, tag = 'scoped memory for tpu_custom_call.1']
    #allocation7 [shape = 'u8[8192]{0}', space=vmem, size = 0x2000, scoped, tag = 'input window, operand 2, single buffered']
    #allocation8 [shape = 'u8[8192]{0}', space=vmem, size = 0x2000, scoped, tag = 'input window, operand 3, single buffered']
    #allocation9 [shape = 's32[1]{0}', space=sflag, size = 0x4, scoped, tag = 'scoped memory for tpu_custom_call.1']
    #allocation10 [shape = 'u8[8192]{0}', space=vmem, size = 0x2000, scoped, tag = 'output window, operand 0, single buffered']
    %10 = vsyncpa [#allocation3], 0
    %11 = vsyncpa [#allocation6], 0
    %12 = vsyncpa [#allocation9], 0
    %13 = vsyncpa [#allocation4], 0
    // Predicated region
    $region2: #{tpu_custom_call.1} parent=1 // pred_check
      _
    $region3: #{tpu_custom_call.1} parent=1 // pred_check_branch
      %15 = sbr.rel (0) target = $region5
    $region4: #{tpu_custom_call.1} parent=1 // pred_region
      %s17 = ssub.s32 256, 256
      %18 = vsyncadd [#allocation3], %s17
      %s19 = sshll.u32 [#allocation2], 4
      %s20 = int_to_ptr.vmem [resolvable:$true] %s19
      %25 = dma.hbm_to_vmem [thread:$0]  %s0, 256, %s20, [#allocation3], 128, 128, 8
    $region5: #{tpu_custom_call.1} parent=1 // pred_fallthru
      _
    // Predicated region
    $region6: #{tpu_custom_call.1} parent=1 // pred_check
      _
    $region7: #{tpu_custom_call.1} parent=1 // pred_check_branch
      %27 = sbr.rel (0) target = $region9
    $region8: #{tpu_custom_call.1} parent=1 // pred_region
      %s29 = ssub.s32 256, 256
      %30 = vsyncadd [#allocation6], %s29
      %s31 = sshll.u32 [#allocation5], 4
      %s32 = int_to_ptr.vmem [resolvable:$true] %s31
      %37 = dma.hbm_to_vmem [thread:$0]  %s1, 256, %s32, [#allocation6], 128, 128, 8
    $region9: #{tpu_custom_call.1} parent=1 // pred_fallthru
      _
    // Predicated region
    $region10: #{tpu_custom_call.1} parent=1 // pred_check
      _
    $region11: #{tpu_custom_call.1} parent=1 // pred_check_branch
      %39 = sbr.rel (0) target = $region13
    $region12: #{tpu_custom_call.1} parent=1 // pred_region
      %s41 = ssub.s32 256, 256
      %42 = vsyncadd [#allocation6], %s41
      %s43 = sshll.u32 [#allocation7], 4
      %s44 = int_to_ptr.vmem [resolvable:$true] %s43
      %49 = dma.hbm_to_vmem [thread:$0]  %s2, 256, %s44, [#allocation6], 128, 128, 8
    $region13: #{tpu_custom_call.1} parent=1 // pred_fallthru
      _
    // Predicated region
    $region14: #{tpu_custom_call.1} parent=1 // pred_check
      _
    $region15: #{tpu_custom_call.1} parent=1 // pred_check_branch
      %51 = sbr.rel (0) target = $region17
    $region16: #{tpu_custom_call.1} parent=1 // pred_region
      %s53 = ssub.s32 256, 256
      %54 = vsyncadd [#allocation9], %s53
      %s55 = sshll.u32 [#allocation8], 4
      %s56 = int_to_ptr.vmem [resolvable:$true] %s55
      %61 = dma.hbm_to_vmem [thread:$0]  %s3, 256, %s56, [#allocation9], 128, 128, 8
    $region17: #{tpu_custom_call.1} parent=1 // pred_fallthru
      _
    // Predicated region
    $region18: #{tpu_custom_call.1} parent=1 // pred_check
      _
    $region19: #{tpu_custom_call.1} parent=1 // pred_check_branch
      %63 = sbr.rel (0) target = $region21
    $region20: #{tpu_custom_call.1} parent=1 // pred_region
      _
    $region21: #{tpu_custom_call.1} parent=1 // pred_fallthru
      _
    // Predicated region
    $region22: #{tpu_custom_call.1} parent=1 // pred_check
      _
    $region23: #{tpu_custom_call.1} parent=1 // pred_check_branch
      %65 = sbr.rel (0) target = $region25
    $region24: #{tpu_custom_call.1} parent=1 // pred_region
      %66 = dma.done [#allocation3], 256
    $region25: #{tpu_custom_call.1} parent=1 // pred_fallthru
      _
    // Predicated region
    $region26: #{tpu_custom_call.1} parent=1 // pred_check
      _
    $region27: #{tpu_custom_call.1} parent=1 // pred_check_branch
      %68 = sbr.rel (0) target = $region29
    $region28: #{tpu_custom_call.1} parent=1 // pred_region
      %69 = dma.done [#allocation6], 256
    $region29: #{tpu_custom_call.1} parent=1 // pred_fallthru
      _
    // Predicated region
    $region30: #{tpu_custom_call.1} parent=1 // pred_check
      _
    $region31: #{tpu_custom_call.1} parent=1 // pred_check_branch
      %71 = sbr.rel (0) target = $region33
    $region32: #{tpu_custom_call.1} parent=1 // pred_region
      %72 = dma.done [#allocation6], 256
    $region33: #{tpu_custom_call.1} parent=1 // pred_fallthru
      _
    // Predicated region
    $region34: #{tpu_custom_call.1} parent=1 // pred_check
      _
    $region35: #{tpu_custom_call.1} parent=1 // pred_check_branch
      %74 = sbr.rel (0) target = $region37
    $region36: #{tpu_custom_call.1} parent=1 // pred_region
      %75 = dma.done [#allocation9], 256
    $region37: #{tpu_custom_call.1} parent=1 // pred_fallthru
      _
    %v76 = vld [vmem:[#allocation2] sm:$0xff]
    %v77 = vld [vmem:[#allocation2 + $0x8] sm:$0xff]
    %v78 = vld [vmem:[#allocation7] sm:$0xff]
    %v79 = vld [vmem:[#allocation7 + $0x8] sm:$0xff]
    %v80 = vld [vmem:[#allocation5] sm:$0xff]
    %v81 = vld [vmem:[#allocation5 + $0x8] sm:$0xff]
    %v82 = vld [vmem:[#allocation8] sm:$0xff]
    %v83 = vld [vmem:[#allocation8 + $0x8] sm:$0xff]
    %vm84 = vcmask 130048
    %v86 = vsel %vm84, %v80, 0
    %v89 = vsel %vm84, %v81, 0
    %91 = vmatprep.subr.mxu0 0.0
    %92 = vmatpush1.msra.mxu0 0.0
    %93 = vmatprep.subr.mxu0 0.0
    %94 = vmatpush1.msra.mxu0 0.0
    %95 = vmatprep.subr.mxu0 0.0
    %96 = vmatpush1.msra.mxu0 0.0
    %97 = vmatprep.subr.mxu0 0.0
    %98 = vmatpush1.msra.mxu0 0.0
    %99 = vmatprep.subr.mxu0 0.0
    %100 = vmatpush1.msra.mxu0 0.0
    %101 = vmatprep.subr.mxu0 0.0
    %102 = vmatpush1.msra.mxu0 0.0
    %103 = vmatprep.subr.mxu0 0.0
    %104 = vmatpush1.msra.mxu0 0.0
    %105 = vmatprep.subr.mxu0 0.0
    %106 = vmatpush1.msra.mxu0 0.0
    %107 = vmatprep.subr.mxu0 0.0
    %108 = vmatpush1.msra.mxu0 0.0
    %109 = vmatprep.subr.mxu0 0.0
    %110 = vmatpush1.msra.mxu0 0.0
    %111 = vmatprep.subr.mxu0 0.0
    %112 = vmatpush1.msra.mxu0 0.0
    %113 = vmatprep.subr.mxu0 0.0
    %114 = vmatpush1.msra.mxu0 0.0
    %115 = vmatprep.subr.mxu0 0.0
    %116 = vmatpush1.msra.mxu0 0.0
    %117 = vmatprep.subr.mxu0 0.0
    %118 = vmatpush1.msra.mxu0 0.0
    %119 = vmatprep.subr.mxu0 0.0
    %120 = vmatpush1.msra.mxu0 %v83
    %121 = vmatprep.subr.mxu0 0.0
    %122 = vmatpush1.msra.mxu0 %v82
    %123 = vmatprep.subr.mxu0 0.0
    %124 = vmatpush2.msra.mxu0 0.0
    %125 = vmatprep.subr.mxu0 0.0
    %126 = vmatpush2.msra.mxu0 0.0
    %127 = vmatprep.subr.mxu0 0.0
    %128 = vmatpush2.msra.mxu0 0.0
    %129 = vmatprep.subr.mxu0 0.0
    %130 = vmatpush2.msra.mxu0 0.0
    %131 = vmatprep.subr.mxu0 0.0
    %132 = vmatpush2.msra.mxu0 0.0
    %133 = vmatprep.subr.mxu0 0.0
    %134 = vmatpush2.msra.mxu0 0.0
    %135 = vmatprep.subr.mxu0 0.0
    %136 = vmatpush2.msra.mxu0 0.0
    %137 = vmatprep.subr.mxu0 0.0
    %138 = vmatpush2.msra.mxu0 0.0
    %139 = vmatprep.subr.mxu0 0.0
    %140 = vmatpush2.msra.mxu0 0.0
    %141 = vmatprep.subr.mxu0 0.0
    %142 = vmatpush2.msra.mxu0 0.0
    %143 = vmatprep.subr.mxu0 0.0
    %144 = vmatpush2.msra.mxu0 0.0
    %145 = vmatprep.subr.mxu0 0.0
    %146 = vmatpush2.msra.mxu0 0.0
    %147 = vmatprep.subr.mxu0 0.0
    %148 = vmatpush2.msra.mxu0 0.0
    %149 = vmatprep.subr.mxu0 0.0
    %150 = vmatpush2.msra.mxu0 0.0
    %151 = vmatprep.subr.mxu0 0.0
    %152 = vmatpush2.msra.mxu0 0.0
    %153 = vmatprep.subr.mxu0 0.0
    %154 = vmatpush2.msra.mxu0 0.0
    %155 = vmatprep.mubr.f32.mxu0 0.0
    %156 = vmatmul.mubr.f32.gmra.mxu0 %v86
    %v157 = vpop.f32.mrf.mxu0
    %v158 = vadd.f32 0.0, %v157
    %v159 = vpop.f32.mrf.mxu0
    %160 = vmatprep.mubr.f32.mxu0 0.0
    %161 = vmatmul.mubr.f32.gmra.mxu0 %v89
    %v162 = vpop.f32.mrf.mxu0
    %v163 = vadd.f32 0.0, %v162
    %v164 = vpop.f32.mrf.mxu0
    %165 = vdwg.mxu0
    %v167 = vsel %vm84, %v76, 0
    %v170 = vsel %vm84, %v77, 0
    %172 = vmatprep.subr.mxu0 0.0
    %173 = vmatpush1.msra.mxu0 0.0
    %174 = vmatprep.subr.mxu0 0.0
    %175 = vmatpush1.msra.mxu0 0.0
    %176 = vmatprep.subr.mxu0 0.0
    %177 = vmatpush1.msra.mxu0 0.0
    %178 = vmatprep.subr.mxu0 0.0
    %179 = vmatpush1.msra.mxu0 0.0
    %180 = vmatprep.subr.mxu0 0.0
    %181 = vmatpush1.msra.mxu0 0.0
    %182 = vmatprep.subr.mxu0 0.0
    %183 = vmatpush1.msra.mxu0 0.0
    %184 = vmatprep.subr.mxu0 0.0
    %185 = vmatpush1.msra.mxu0 0.0
    %186 = vmatprep.subr.mxu0 0.0
    %187 = vmatpush1.msra.mxu0 0.0
    %188 = vmatprep.subr.mxu0 0.0
    %189 = vmatpush1.msra.mxu0 0.0
    %190 = vmatprep.subr.mxu0 0.0
    %191 = vmatpush1.msra.mxu0 0.0
    %192 = vmatprep.subr.mxu0 0.0
    %193 = vmatpush1.msra.mxu0 0.0
    %194 = vmatprep.subr.mxu0 0.0
    %195 = vmatpush1.msra.mxu0 0.0
    %196 = vmatprep.subr.mxu0 0.0
    %197 = vmatpush1.msra.mxu0 0.0
    %198 = vmatprep.subr.mxu0 0.0
    %199 = vmatpush1.msra.mxu0 0.0
    %200 = vmatprep.subr.mxu0 0.0
    %201 = vmatpush1.msra.mxu0 %v79
    %202 = vmatprep.subr.mxu0 0.0
    %203 = vmatpush1.msra.mxu0 %v78
    %204 = vmatprep.subr.mxu0 0.0
    %205 = vmatpush2.msra.mxu0 0.0
    %206 = vmatprep.subr.mxu0 0.0
    %207 = vmatpush2.msra.mxu0 0.0
    %208 = vmatprep.subr.mxu0 0.0
    %209 = vmatpush2.msra.mxu0 0.0
    %210 = vmatprep.subr.mxu0 0.0
    %211 = vmatpush2.msra.mxu0 0.0
    %212 = vmatprep.subr.mxu0 0.0
    %213 = vmatpush2.msra.mxu0 0.0
    %214 = vmatprep.subr.mxu0 0.0
    %215 = vmatpush2.msra.mxu0 0.0
    %216 = vmatprep.subr.mxu0 0.0
    %217 = vmatpush2.msra.mxu0 0.0
    %218 = vmatprep.subr.mxu0 0.0
    %219 = vmatpush2.msra.mxu0 0.0
    %220 = vmatprep.subr.mxu0 0.0
    %221 = vmatpush2.msra.mxu0 0.0
    %222 = vmatprep.subr.mxu0 0.0
    %223 = vmatpush2.msra.mxu0 0.0
    %224 = vmatprep.subr.mxu0 0.0
    %225 = vmatpush2.msra.mxu0 0.0
    %226 = vmatprep.subr.mxu0 0.0
    %227 = vmatpush2.msra.mxu0 0.0
    %228 = vmatprep.subr.mxu0 0.0
    %229 = vmatpush2.msra.mxu0 0.0
    %230 = vmatprep.subr.mxu0 0.0
    %231 = vmatpush2.msra.mxu0 0.0
    %232 = vmatprep.subr.mxu0 0.0
    %233 = vmatpush2.msra.mxu0 0.0
    %234 = vmatprep.subr.mxu0 0.0
    %235 = vmatpush2.msra.mxu0 0.0
    %236 = vmatprep.mubr.f32.mxu0 0.0
    %237 = vmatmul.mubr.f32.gmra.mxu0 %v167
    %v238 = vpop.f32.mrf.mxu0
    %v239 = vadd.f32 %v158, %v238
    %v240 = vpop.f32.mrf.mxu0
    %241 = vmatprep.mubr.f32.mxu0 0.0
    %242 = vmatmul.mubr.f32.gmra.mxu0 %v170
    %v243 = vpop.f32.mrf.mxu0
    %v244 = vadd.f32 %v163, %v243
    %v245 = vpop.f32.mrf.mxu0
    %246 = vdwg.mxu0
    %v247 = vld [vmem:[%s4] sm:$0x1]
    %v249 = vlaneseq
    %v250 = vshrl.u32 %v249, 7
    %v251 = vsub.s32 0, %v250
    %v252 = vrot.slane %v247, %v251
    %v254 = vadd.f32 %v239, %v252
    %v255 = vadd.f32 %v244, %v252
    %vm256 = vcmask 261120
    %257 = vst.msk [vmem:[#allocation10] sm:$0xff] %vm256, %v254
    %258 = vst.msk [vmem:[#allocation10 + $0x8] sm:$0xff] %vm256, %v255
    // Predicated region
    $region38: #{tpu_custom_call.1} parent=1 // pred_check
      _
    $region39: #{tpu_custom_call.1} parent=1 // pred_check_branch
      %260 = sbr.rel (0) target = $region41
    $region40: #{tpu_custom_call.1} parent=1 // pred_region
      %s262 = ssub.s32 256, 256
      %263 = vsyncadd [#allocation4], %s262
      %s264 = sshll.u32 [#allocation10], 4
      %s265 = int_to_ptr.vmem [resolvable:$true] %s264
      %270 = dma.vmem_to_hbm [thread:$0]  %s265, 256, %s5, [#allocation4], 128, 128, 8
    $region41: #{tpu_custom_call.1} parent=1 // pred_fallthru
      _
    // Predicated region
    $region42: #{tpu_custom_call.1} parent=1 // pred_check
      _
    $region43: #{tpu_custom_call.1} parent=1 // pred_check_branch
      %272 = sbr.rel (0) target = $region45
    $region44: #{tpu_custom_call.1} parent=1 // pred_region
      %273 = dma.done [#allocation4], 256
    $region45: #{tpu_custom_call.1} parent=1 // pred_fallthru
      _
    %274 = vsyncpa [#allocation3], 1
    %275 = vsyncpa [#allocation6], 1
    %276 = vsyncpa [#allocation9], 1
    %277 = vsyncpa [#allocation4], 1

</llo_original>
